<compile_context>
chip_gen: v7x
topology: tpu7x:2x2x1
jax: 0.10.0
libtpu: 0.0.40
codegen_flags: <defaults>
</compile_context>

<pallas_src>
import functools
import math

import jax
import jax.numpy as jnp
from jax import lax
from jax.experimental import pallas as pl
from jax.experimental.pallas import tpu as pltpu

EPS = 1e-5  # PyTorch nn.LayerNorm default


# --------------------------------------------------------------- utilities

_VMEM_LIMIT = None


def _vmem_limit_bytes():
    """Generation-aware scoped-VMEM request (~3/4 of physical, capped)."""
    global _VMEM_LIMIT
    if _VMEM_LIMIT is None:
        try:
            cap = int(pltpu.get_tpu_info().vmem_capacity_bytes)
        except Exception:
            cap = 64 * 1024 * 1024  # conservative default (works on v7x too)
        _VMEM_LIMIT = min(cap * 3 // 4, 100 * 1024 * 1024)
    return _VMEM_LIMIT


def _ln_f32(x, g, b):
    """Two-pass LayerNorm in f32 (matches PyTorch nn.LayerNorm, biased var)."""
    mu = jnp.mean(x, axis=-1, keepdims=True)
    xc = x - mu
    var = jnp.mean(xc * xc, axis=-1, keepdims=True)
    return xc * lax.rsqrt(var + EPS) * g + b


def _const_spec(shape):
    """Grid-constant operand: replicated block, single-buffered (never re-fetched)."""
    nd = len(shape)
    return pl.BlockSpec(shape, lambda *_: (0,) * nd,
                        pipeline_mode=pl.Buffered(1))


# ----------------------------- fused kernels --------------------------------

def _attn_sublayer_kernel(x_ref, g_ref, bln_ref,
                          wq_ref, bq_ref, wk_ref, bk_ref, wv_ref, bv_ref,
                          wo_ref, bo_ref, o_ref, xn_sc, acc_sc, *, scale):
    """Fused pre-norm self-attention sublayer.

    Grid = (batch, head).  Per step the refs are:
      x/o   : (1, S, D)           (block index depends on batch only)
      wq/wk/wv : (1, D, dk) bf16  (per-head slice, indexed by head)
      bq/bk/bv : (1, 1, dk) f32
      wo    : (1, dk, D) bf16,  bo: (1, D) f32
      xn_sc : (S, D) bf16 scratch (LN1 output, computed once per batch)
      acc_sc: (S, D) f32 scratch  (sum_h a_h @ Wo[h])
    """
    h = pl.program_id(1)

    @pl.when(h == 0)
    def _():
        x = x_ref[0].astype(jnp.float32)
        xn_sc[...] = _ln_f32(x, g_ref[...], bln_ref[...]).astype(jnp.bfloat16)
        acc_sc[...] = jnp.zeros_like(acc_sc)

    xn = xn_sc[...]                                          # (S, D) bf16
    q = (jnp.dot(xn, wq_ref[0], preferred_element_type=jnp.float32)
         + bq_ref[0]) * scale                                # fold 1/sqrt(dk)
    k = jnp.dot(xn, wk_ref[0], preferred_element_type=jnp.float32) + bk_ref[0]
    v = jnp.dot(xn, wv_ref[0], preferred_element_type=jnp.float32) + bv_ref[0]

    # QK^T without materializing k.T (contract last axis of both operands).
    s = lax.dot_general(q.astype(jnp.bfloat16), k.astype(jnp.bfloat16),
                        (((1,), (1,)), ((), ())),
                        preferred_element_type=jnp.float32)   # (S, S)
    # TODO(synk): additive attention mask (Encoder called with mask=None here)
    # would be applied to `s` before the softmax.
    # TODO(synk): for long sequences convert to flash-style KV/Q tiling; at the
    # sizes handled here the full (S, S) scores fit comfortably in VMEM.
    m = jnp.max(s, axis=-1, keepdims=True)
    e = jnp.exp(s - m)
    p = e * pl.reciprocal(jnp.sum(e, axis=-1, keepdims=True), approx=True)
    ah = jnp.dot(p.astype(jnp.bfloat16), v.astype(jnp.bfloat16),
                 preferred_element_type=jnp.float32)          # (S, dk)
    # concat_h(a_h) @ Wo == sum_h a_h @ Wo[h*dk:(h+1)*dk, :]
    acc_sc[...] += jnp.dot(ah.astype(jnp.bfloat16), wo_ref[0],
                           preferred_element_type=jnp.float32)

    @pl.when(h == pl.num_programs(1) - 1)
    def _():
        o_ref[0] = (acc_sc[...] + bo_ref[...]
                    + x_ref[0].astype(jnp.float32)).astype(o_ref.dtype)


def _ffn_sublayer_kernel(x_ref, g_ref, bln_ref, w1_ref, b1_ref, w2_ref, b2_ref,
                         fg_ref, fb_ref, o_ref, xn_sc, acc_sc, *,
                         apply_final_ln):
    """Fused pre-norm FFN sublayer, tiled over d_ff.

    Grid = (row-blocks, F-chunks).  out = x + relu(LN2(x) @ W1 + b1) @ W2 + b2,
    optionally followed by the Encoder's trailing LayerNorm (last layer only).
    """
    f = pl.program_id(1)

    @pl.when(f == 0)
    def _():
        x = x_ref[...].astype(jnp.float32)
        xn_sc[...] = _ln_f32(x, g_ref[...], bln_ref[...]).astype(jnp.bfloat16)
        acc_sc[...] = jnp.zeros_like(acc_sc)

    hdn = jnp.dot(xn_sc[...], w1_ref[...],
                  preferred_element_type=jnp.float32) + b1_ref[...]
    hdn = jnp.maximum(hdn, 0.0).astype(jnp.bfloat16)
    acc_sc[...] += jnp.dot(hdn, w2_ref[...],
                           preferred_element_type=jnp.float32)

    @pl.when(f == pl.num_programs(1) - 1)
    def _():
        y = acc_sc[...] + b2_ref[...] + x_ref[...].astype(jnp.float32)
        if apply_final_ln:  # static flag: trailing Encoder LayerNorm fused here
            y = _ln_f32(y, fg_ref[...], fb_ref[...])
        o_ref[...] = y.astype(o_ref.dtype)


# ------------------------------ kernel wrappers ------------------------------

def attention_sublayer(x, p, *, scale):
    B, S, D = x.shape
    H, _, dk = p["wq"].shape
    xspec = pl.BlockSpec((1, S, D), lambda b, h: (b, 0, 0))

    def head_spec(shape):
        return pl.BlockSpec(shape, lambda b, h: (h, 0, 0))

    return pl.pallas_call(
        functools.partial(_attn_sublayer_kernel, scale=scale),
        out_shape=jax.ShapeDtypeStruct((B, S, D), x.dtype),
        grid=(B, H),
        in_specs=[xspec,
                  _const_spec((1, D)), _const_spec((1, D)),
                  head_spec((1, D, dk)), head_spec((1, 1, dk)),
                  head_spec((1, D, dk)), head_spec((1, 1, dk)),
                  head_spec((1, D, dk)), head_spec((1, 1, dk)),
                  head_spec((1, dk, D)), _const_spec((1, D))],
        out_specs=xspec,
        scratch_shapes=[pltpu.VMEM((S, D), jnp.bfloat16),
                        pltpu.VMEM((S, D), jnp.float32)],
        compiler_params=pltpu.CompilerParams(
            dimension_semantics=("parallel", "arbitrary"),
            vmem_limit_bytes=_vmem_limit_bytes()),
    )(x, p["ln1_g"], p["ln1_b"],
      p["wq"], p["bq"], p["wk"], p["bk"], p["wv"], p["bv"],
      p["wo"], p["bo"])


def _pick_row_tile(M):
    # >=128 rows per tile (256 when enough rows); rows are padded to a multiple.
    return 256 if M >= 256 else 128


def _pick_f_tile(F, D):
    # Largest F-chunk dividing F whose streamed W1+W2 chunks (bf16, double
    # buffered) stay within ~40% of the scoped-VMEM budget.
    budget = int(0.4 * _vmem_limit_bytes())
    for tf in (4096, 2048, 1024, 512, 256, 128):
        if F % tf == 0 and 8 * D * tf <= budget:
            return tf
    return F


def ffn_sublayer(x2, p, final_ln=None):
    M, D = x2.shape
    F = p["w1"].shape[1]
    tm = _pick_row_tile(M)
    Mp = pl.cdiv(M, tm) * tm
    xp = jnp.pad(x2, ((0, Mp - M), (0, 0))) if Mp != M else x2
    tf = _pick_f_tile(F, D)

    fg = final_ln["g"] if final_ln is not None else p["ln2_g"]
    fb = final_ln["b"] if final_ln is not None else p["ln2_b"]

    row_spec = pl.BlockSpec((tm, D), lambda i, f: (i, 0))
    out = pl.pallas_call(
        functools.partial(_ffn_sublayer_kernel,
                          apply_final_ln=final_ln is not None),
        out_shape=jax.ShapeDtypeStruct((Mp, D), x2.dtype),
        grid=(Mp // tm, F // tf),
        in_specs=[row_spec,
                  _const_spec((1, D)), _const_spec((1, D)),
                  pl.BlockSpec((D, tf), lambda i, f: (0, f)),
                  pl.BlockSpec((1, tf), lambda i, f: (0, f)),
                  pl.BlockSpec((tf, D), lambda i, f: (f, 0)),
                  _const_spec((1, D)),
                  _const_spec((1, D)), _const_spec((1, D))],
        out_specs=row_spec,
        scratch_shapes=[pltpu.VMEM((tm, D), jnp.bfloat16),
                        pltpu.VMEM((tm, D), jnp.float32)],
        compiler_params=pltpu.CompilerParams(
            dimension_semantics=("parallel", "arbitrary"),
            vmem_limit_bytes=_vmem_limit_bytes()),
    )(xp, p["ln2_g"], p["ln2_b"], p["w1"], p["b1"], p["w2"], p["b2"], fg, fb)
    return out[:M] if Mp != M else out


# ------------------------------ Encoder forward ------------------------------

def init_params(key, n_layers, d_model, n_heads, d_ff):
    dk = d_model // n_heads

    def dense_w(k, din, dout):
        return 0.02 * jax.random.normal(k, (din, dout), jnp.float32)

    def heads_in(w):  # (D, D) -> (H, D, dk): per-head output columns
        return jnp.transpose(w.reshape(d_model, n_heads, dk), (1, 0, 2))

    layers = []
    for lk in jax.random.split(key, n_layers):
        ks = jax.random.split(lk, 6)
        wq = dense_w(ks[0], d_model, d_model)
        wk = dense_w(ks[1], d_model, d_model)
        wv = dense_w(ks[2], d_model, d_model)
        wo = dense_w(ks[3], d_model, d_model)
        w1 = dense_w(ks[4], d_model, d_ff)
        w2 = dense_w(ks[5], d_ff, d_model)
        layers.append(dict(
            wq=heads_in(wq).astype(jnp.bfloat16),
            wk=heads_in(wk).astype(jnp.bfloat16),
            wv=heads_in(wv).astype(jnp.bfloat16),
            wo=wo.reshape(n_heads, dk, d_model).astype(jnp.bfloat16),
            bq=jnp.zeros((n_heads, 1, dk), jnp.float32),
            bk=jnp.zeros((n_heads, 1, dk), jnp.float32),
            bv=jnp.zeros((n_heads, 1, dk), jnp.float32),
            bo=jnp.zeros((1, d_model), jnp.float32),
            w1=w1.astype(jnp.bfloat16), b1=jnp.zeros((1, d_ff), jnp.float32),
            w2=w2.astype(jnp.bfloat16), b2=jnp.zeros((1, d_model), jnp.float32),
            ln1_g=jnp.ones((1, d_model), jnp.float32),
            ln1_b=jnp.zeros((1, d_model), jnp.float32),
            ln2_g=jnp.ones((1, d_model), jnp.float32),
            ln2_b=jnp.zeros((1, d_model), jnp.float32),
        ))
    final = dict(g=jnp.ones((1, d_model), jnp.float32),
                 b=jnp.zeros((1, d_model), jnp.float32))
    return dict(layers=layers, final_norm=final, n_heads=n_heads)


def encoder_forward(x, params, mask=None):
    # TODO(synk): `mask` is None in this synthetic run; the fused attention
    # kernel documents where an additive mask would be applied.
    B, S, D = x.shape
    H = params["n_heads"]
    dk = D // H
    scale = 1.0 / math.sqrt(dk)
    n_layers = len(params["layers"])

    for li, p in enumerate(params["layers"]):
        x = attention_sublayer(x, p, scale=scale)
        # Trailing Encoder LayerNorm is fused into the last layer's FFN kernel.
        fin = params["final_norm"] if li == n_layers - 1 else None
        x = ffn_sublayer(x.reshape(B * S, D), p, final_ln=fin).reshape(B, S, D)
    return x


if __name__ == "__main__":
    B, S, D, H, DFF, NLAYERS = 2, 8, 32, 4, 64, 2
    key = jax.random.PRNGKey(0)
    kx, kp = jax.random.split(key)
    x = jax.random.normal(kx, (B, S, D), jnp.float32)
    params = init_params(kp, NLAYERS, D, H, DFF)

    out = encoder_forward(x, params, mask=None)
    out = jax.block_until_ready(out)
    assert out.shape == (B, S, D) and out.dtype == jnp.float32
    assert bool(jnp.all(jnp.isfinite(out)))
    print("KERNEL_OK")
</pallas_src>

<mosaic_0001>
module attributes {stable_mosaic.version = 11 : i64} {
  func.func @_attn_sublayer_kernel(%arg0: i32, %arg1: i32, %arg2: memref<1x8x32xf32, #tpu.memory_space<vmem>>, %arg3: memref<1x32xf32, #tpu.memory_space<vmem>>, %arg4: memref<1x32xf32, #tpu.memory_space<vmem>>, %arg5: memref<1x32x8xbf16, #tpu.memory_space<vmem>>, %arg6: memref<1x1x8xf32, #tpu.memory_space<vmem>>, %arg7: memref<1x32x8xbf16, #tpu.memory_space<vmem>>, %arg8: memref<1x1x8xf32, #tpu.memory_space<vmem>>, %arg9: memref<1x32x8xbf16, #tpu.memory_space<vmem>>, %arg10: memref<1x1x8xf32, #tpu.memory_space<vmem>>, %arg11: memref<1x8x32xbf16, #tpu.memory_space<vmem>>, %arg12: memref<1x32xf32, #tpu.memory_space<vmem>>, %arg13: memref<1x8x32xf32, #tpu.memory_space<vmem>>, %arg14: memref<8x32xbf16, #tpu.memory_space<vmem>>, %arg15: memref<8x32xf32, #tpu.memory_space<vmem>>) attributes {dimension_semantics = [#tpu.dimension_semantics<parallel>, #tpu.dimension_semantics<arbitrary>], iteration_bounds = array<i64: 2, 4>, scalar_prefetch = 0 : i64, scratch_operands = 2 : i64, tpu.core_type = #tpu.core_type<tc>, window_params = [{transform_indices = @transform_0, window_bounds = array<i64: 1, 8, 32>}, {pipeline_mode = #tpu.pipeline_mode<synchronous>, transform_indices = @transform_1, window_bounds = array<i64: 1, 32>}, {pipeline_mode = #tpu.pipeline_mode<synchronous>, transform_indices = @transform_2, window_bounds = array<i64: 1, 32>}, {transform_indices = @transform_3, window_bounds = array<i64: 1, 32, 8>}, {transform_indices = @transform_4, window_bounds = array<i64: 1, 1, 8>}, {transform_indices = @transform_5, window_bounds = array<i64: 1, 32, 8>}, {transform_indices = @transform_6, window_bounds = array<i64: 1, 1, 8>}, {transform_indices = @transform_7, window_bounds = array<i64: 1, 32, 8>}, {transform_indices = @transform_8, window_bounds = array<i64: 1, 1, 8>}, {transform_indices = @transform_9, window_bounds = array<i64: 1, 8, 32>}, {pipeline_mode = #tpu.pipeline_mode<synchronous>, transform_indices = @transform_10, window_bounds = array<i64: 1, 32>}, {transform_indices = @transform_11, window_bounds = array<i64: 1, 8, 32>}]} {
    %c0_i32 = arith.constant 0 : i32
    %0 = arith.cmpi eq, %arg1, %c0_i32 : i32
    %1 = arith.extui %0 : i1 to i32
    %c0_i32_0 = arith.constant 0 : i32
    %2 = arith.cmpi ne, %1, %c0_i32_0 : i32
    scf.if %2 {
      %c0_36 = arith.constant 0 : index
      %c0_37 = arith.constant 0 : index
      %c0_38 = arith.constant 0 : index
      %53 = vector.load %arg2[%c0_36, %c0_37, %c0_38] : memref<1x8x32xf32, #tpu.memory_space<vmem>>, vector<1x8x32xf32>
      %54 = vector.shape_cast %53 : vector<1x8x32xf32> to vector<8x32xf32>
      %c0_39 = arith.constant 0 : index
      %c0_40 = arith.constant 0 : index
      %55 = vector.load %arg3[%c0_39, %c0_40] : memref<1x32xf32, #tpu.memory_space<vmem>>, vector<1x32xf32>
      %c0_41 = arith.constant 0 : index
      %c0_42 = arith.constant 0 : index
      %56 = vector.load %arg4[%c0_41, %c0_42] : memref<1x32xf32, #tpu.memory_space<vmem>>, vector<1x32xf32>
      %cst_43 = arith.constant dense<0.000000e+00> : vector<8xf32>
      %57 = vector.multi_reduction <add>, %54, %cst_43 [1] : vector<8x32xf32> to vector<8xf32>
      %58 = vector.shape_cast %57 : vector<8xf32> to vector<8x1xf32>
      %cst_44 = arith.constant 3.200000e+01 : f32
      %59 = vector.broadcast %cst_44 : f32 to vector<8x1xf32>
      %60 = arith.divf %58, %59 : vector<8x1xf32>
      %61 = vector.broadcast %60 : vector<8x1xf32> to vector<8x32xf32>
      %62 = arith.subf %54, %61 : vector<8x32xf32>
      %63 = arith.mulf %62, %62 : vector<8x32xf32>
      %cst_45 = arith.constant dense<0.000000e+00> : vector<8xf32>
      %64 = vector.multi_reduction <add>, %63, %cst_45 [1] : vector<8x32xf32> to vector<8xf32>
      %65 = vector.shape_cast %64 : vector<8xf32> to vector<8x1xf32>
      %cst_46 = arith.constant 3.200000e+01 : f32
      %66 = vector.broadcast %cst_46 : f32 to vector<8x1xf32>
      %67 = arith.divf %65, %66 : vector<8x1xf32>
      %cst_47 = arith.constant 9.99999974E-6 : f32
      %68 = vector.broadcast %cst_47 : f32 to vector<8x1xf32>
      %69 = arith.addf %67, %68 : vector<8x1xf32>
      %70 = math.rsqrt %69 : vector<8x1xf32>
      %71 = vector.broadcast %70 : vector<8x1xf32> to vector<8x32xf32>
      %72 = arith.mulf %62, %71 : vector<8x32xf32>
      %73 = vector.broadcast %55 : vector<1x32xf32> to vector<8x32xf32>
      %74 = arith.mulf %72, %73 : vector<8x32xf32>
      %75 = vector.broadcast %56 : vector<1x32xf32> to vector<8x32xf32>
      %76 = arith.addf %74, %75 : vector<8x32xf32>
      %77 = arith.truncf %76 : vector<8x32xf32> to vector<8x32xbf16>
      %c0_48 = arith.constant 0 : index
      %c0_49 = arith.constant 0 : index
      %78 = vector.load %arg14[%c0_48, %c0_49] : memref<8x32xbf16, #tpu.memory_space<vmem>>, vector<8x32xbf16>
      tpu.vector_store %arg14[%c0_48, %c0_49], %77 {strides = array<i32>} : memref<8x32xbf16, #tpu.memory_space<vmem>>, vector<8x32xbf16>,
      %cst_50 = arith.constant 0.000000e+00 : f32
      %79 = vector.broadcast %cst_50 : f32 to vector<8x32xf32>
      %c0_51 = arith.constant 0 : index
      %c0_52 = arith.constant 0 : index
      %80 = vector.load %arg15[%c0_51, %c0_52] : memref<8x32xf32, #tpu.memory_space<vmem>>, vector<8x32xf32>
      tpu.vector_store %arg15[%c0_51, %c0_52], %79 {strides = array<i32>} : memref<8x32xf32, #tpu.memory_space<vmem>>, vector<8x32xf32>,
    } else {
    }
    %c0 = arith.constant 0 : index
    %c0_1 = arith.constant 0 : index
    %3 = vector.load %arg14[%c0, %c0_1] : memref<8x32xbf16, #tpu.memory_space<vmem>>, vector<8x32xbf16>
    %c0_2 = arith.constant 0 : index
    %c0_3 = arith.constant 0 : index
    %c0_4 = arith.constant 0 : index
    %4 = vector.load %arg5[%c0_2, %c0_3, %c0_4] : memref<1x32x8xbf16, #tpu.memory_space<vmem>>, vector<1x32x8xbf16>
    %5 = vector.shape_cast %4 : vector<1x32x8xbf16> to vector<32x8xbf16>
    %cst = arith.constant dense<0.000000e+00> : vector<8x8xf32>
    %6 = tpu.matmul %3, %5, %cst {dimension_numbers = #tpu.dot_dimension_numbers<[1], [0], [0], [1], [0, 0, 1, 1], [], []>} : vector<8x32xbf16>, vector<32x8xbf16>, vector<8x8xf32> -> vector<8x8xf32>
    %c0_5 = arith.constant 0 : index
    %c0_6 = arith.constant 0 : index
    %c0_7 = arith.constant 0 : index
    %7 = vector.load %arg6[%c0_5, %c0_6, %c0_7] : memref<1x1x8xf32, #tpu.memory_space<vmem>>, vector<1x1x8xf32>
    %8 = vector.shape_cast %7 : vector<1x1x8xf32> to vector<1x8xf32>
    %9 = vector.broadcast %8 : vector<1x8xf32> to vector<8x8xf32>
    %10 = arith.addf %6, %9 : vector<8x8xf32>
    %cst_8 = arith.constant 0.353553385 : f32
    %11 = vector.broadcast %cst_8 : f32 to vector<8x8xf32>
    %12 = arith.mulf %10, %11 : vector<8x8xf32>
    %c0_9 = arith.constant 0 : index
    %c0_10 = arith.constant 0 : index
    %c0_11 = arith.constant 0 : index
    %13 = vector.load %arg7[%c0_9, %c0_10, %c0_11] : memref<1x32x8xbf16, #tpu.memory_space<vmem>>, vector<1x32x8xbf16>
    %14 = vector.shape_cast %13 : vector<1x32x8xbf16> to vector<32x8xbf16>
    %cst_12 = arith.constant dense<0.000000e+00> : vector<8x8xf32>
    %15 = tpu.matmul %3, %14, %cst_12 {dimension_numbers = #tpu.dot_dimension_numbers<[1], [0], [0], [1], [0, 0, 1, 1], [], []>} : vector<8x32xbf16>, vector<32x8xbf16>, vector<8x8xf32> -> vector<8x8xf32>
    %c0_13 = arith.constant 0 : index
    %c0_14 = arith.constant 0 : index
    %c0_15 = arith.constant 0 : index
    %16 = vector.load %arg8[%c0_13, %c0_14, %c0_15] : memref<1x1x8xf32, #tpu.memory_space<vmem>>, vector<1x1x8xf32>
    %17 = vector.shape_cast %16 : vector<1x1x8xf32> to vector<1x8xf32>
    %18 = vector.broadcast %17 : vector<1x8xf32> to vector<8x8xf32>
    %19 = arith.addf %15, %18 : vector<8x8xf32>
    %c0_16 = arith.constant 0 : index
    %c0_17 = arith.constant 0 : index
    %c0_18 = arith.constant 0 : index
    %20 = vector.load %arg9[%c0_16, %c0_17, %c0_18] : memref<1x32x8xbf16, #tpu.memory_space<vmem>>, vector<1x32x8xbf16>
    %21 = vector.shape_cast %20 : vector<1x32x8xbf16> to vector<32x8xbf16>
    %cst_19 = arith.constant dense<0.000000e+00> : vector<8x8xf32>
    %22 = tpu.matmul %3, %21, %cst_19 {dimension_numbers = #tpu.dot_dimension_numbers<[1], [0], [0], [1], [0, 0, 1, 1], [], []>} : vector<8x32xbf16>, vector<32x8xbf16>, vector<8x8xf32> -> vector<8x8xf32>
    %c0_20 = arith.constant 0 : index
    %c0_21 = arith.constant 0 : index
    %c0_22 = arith.constant 0 : index
    %23 = vector.load %arg10[%c0_20, %c0_21, %c0_22] : memref<1x1x8xf32, #tpu.memory_space<vmem>>, vector<1x1x8xf32>
    %24 = vector.shape_cast %23 : vector<1x1x8xf32> to vector<1x8xf32>
    %25 = vector.broadcast %24 : vector<1x8xf32> to vector<8x8xf32>
    %26 = arith.addf %22, %25 : vector<8x8xf32>
    %27 = arith.truncf %12 : vector<8x8xf32> to vector<8x8xbf16>
    %28 = arith.truncf %19 : vector<8x8xf32> to vector<8x8xbf16>
    %cst_23 = arith.constant dense<0.000000e+00> : vector<8x8xf32>
    %29 = tpu.matmul %27, %28, %cst_23 {dimension_numbers = #tpu.dot_dimension_numbers<[1], [1], [0], [0], [0, 0, 1, 0], [], []>} : vector<8x8xbf16>, vector<8x8xbf16>, vector<8x8xf32> -> vector<8x8xf32>
    %cst_24 = arith.constant dense<0xFF800000> : vector<8xf32>
    %30 = vector.multi_reduction <maximumf>, %29, %cst_24 [1] : vector<8x8xf32> to vector<8xf32>
    %31 = vector.shape_cast %30 : vector<8xf32> to vector<8x1xf32>
    %32 = vector.broadcast %31 : vector<8x1xf32> to vector<8x8xf32>
    %33 = arith.subf %29, %32 : vector<8x8xf32>
    %34 = math.exp %33 : vector<8x8xf32>
    %cst_25 = arith.constant dense<0.000000e+00> : vector<8xf32>
    %35 = vector.multi_reduction <add>, %34, %cst_25 [1] : vector<8x8xf32> to vector<8xf32>
    %36 = vector.shape_cast %35 : vector<8xf32> to vector<8x1xf32>
    %37 = tpu.reciprocal %36 {approx = true} : vector<8x1xf32> -> vector<8x1xf32>
    %38 = vector.broadcast %37 : vector<8x1xf32> to vector<8x8xf32>
    %39 = arith.mulf %34, %38 : vector<8x8xf32>
    %40 = arith.truncf %39 : vector<8x8xf32> to vector<8x8xbf16>
    %41 = arith.truncf %26 : vector<8x8xf32> to vector<8x8xbf16>
    %cst_26 = arith.constant dense<0.000000e+00> : vector<8x8xf32>
    %42 = tpu.matmul %40, %41, %cst_26 {dimension_numbers = #tpu.dot_dimension_numbers<[1], [0], [0], [1], [0, 0, 1, 1], [], []>} : vector<8x8xbf16>, vector<8x8xbf16>, vector<8x8xf32> -> vector<8x8xf32>
    %c0_27 = arith.constant 0 : index
    %c0_28 = arith.constant 0 : index
    %43 = vector.load %arg15[%c0_27, %c0_28] : memref<8x32xf32, #tpu.memory_space<vmem>>, vector<8x32xf32>
    %44 = arith.truncf %42 : vector<8x8xf32> to vector<8x8xbf16>
    %c0_29 = arith.constant 0 : index
    %c0_30 = arith.constant 0 : index
    %c0_31 = arith.constant 0 : index
    %45 = vector.load %arg11[%c0_29, %c0_30, %c0_31] : memref<1x8x32xbf16, #tpu.memory_space<vmem>>, vector<1x8x32xbf16>
    %46 = vector.shape_cast %45 : vector<1x8x32xbf16> to vector<8x32xbf16>
    %cst_32 = arith.constant dense<0.000000e+00> : vector<8x32xf32>
    %47 = tpu.matmul %44, %46, %cst_32 {dimension_numbers = #tpu.dot_dimension_numbers<[1], [0], [0], [1], [0, 0, 1, 1], [], []>} : vector<8x8xbf16>, vector<8x32xbf16>, vector<8x32xf32> -> vector<8x32xf32>
    %48 = arith.addf %43, %47 : vector<8x32xf32>
    %c0_33 = arith.constant 0 : index
    %c0_34 = arith.constant 0 : index
    %49 = vector.load %arg15[%c0_33, %c0_34] : memref<8x32xf32, #tpu.memory_space<vmem>>, vector<8x32xf32>
    tpu.vector_store %arg15[%c0_33, %c0_34], %48 {strides = array<i32>} : memref<8x32xf32, #tpu.memory_space<vmem>>, vector<8x32xf32>,
    %c3_i32 = arith.constant 3 : i32
    %50 = arith.cmpi eq, %arg1, %c3_i32 : i32
    %51 = arith.extui %50 : i1 to i32
    %c0_i32_35 = arith.constant 0 : i32
    %52 = arith.cmpi ne, %51, %c0_i32_35 : i32
    scf.if %52 {
      %c0_36 = arith.constant 0 : index
      %c0_37 = arith.constant 0 : index
      %53 = vector.load %arg15[%c0_36, %c0_37] : memref<8x32xf32, #tpu.memory_space<vmem>>, vector<8x32xf32>
      %c0_38 = arith.constant 0 : index
      %c0_39 = arith.constant 0 : index
      %54 = vector.load %arg12[%c0_38, %c0_39] : memref<1x32xf32, #tpu.memory_space<vmem>>, vector<1x32xf32>
      %55 = vector.broadcast %54 : vector<1x32xf32> to vector<8x32xf32>
      %56 = arith.addf %53, %55 : vector<8x32xf32>
      %c0_40 = arith.constant 0 : index
      %c0_41 = arith.constant 0 : index
      %c0_42 = arith.constant 0 : index
      %57 = vector.load %arg2[%c0_40, %c0_41, %c0_42] : memref<1x8x32xf32, #tpu.memory_space<vmem>>, vector<1x8x32xf32>
      %58 = vector.shape_cast %57 : vector<1x8x32xf32> to vector<8x32xf32>
      %59 = arith.addf %56, %58 : vector<8x32xf32>
      %c0_43 = arith.constant 0 : index
      %c0_44 = arith.constant 0 : index
      %c0_45 = arith.constant 0 : index
      %60 = vector.load %arg13[%c0_43, %c0_44, %c0_45] : memref<1x8x32xf32, #tpu.memory_space<vmem>>, vector<1x8x32xf32>
      %61 = vector.shape_cast %60 : vector<1x8x32xf32> to vector<8x32xf32>
      %62 = vector.shape_cast %59 : vector<8x32xf32> to vector<1x8x32xf32>
      tpu.vector_store %arg13[%c0_43, %c0_44, %c0_45], %62 {strides = array<i32>} : memref<1x8x32xf32, #tpu.memory_space<vmem>>, vector<1x8x32xf32>,
    } else {
    }
    return
  }
  func.func @transform_0(%arg0: i32, %arg1: i32) -> (i32, i32, i32) {
    %c0_i32 = arith.constant 0 : i32
    %c0_i32_0 = arith.constant 0 : i32
    %c0_i32_1 = arith.constant 0 : i32
    return %arg0, %c0_i32, %c0_i32_0 : i32, i32, i32
  }
  func.func @transform_1(%arg0: i32, %arg1: i32) -> (i32, i32) {
    %c0_i32 = arith.constant 0 : i32
    %c0_i32_0 = arith.constant 0 : i32
    %c0_i32_1 = arith.constant 0 : i32
    return %c0_i32, %c0_i32_0 : i32, i32
  }
  func.func @transform_2(%arg0: i32, %arg1: i32) -> (i32, i32) {
    %c0_i32 = arith.constant 0 : i32
    %c0_i32_0 = arith.constant 0 : i32
    %c0_i32_1 = arith.constant 0 : i32
    return %c0_i32, %c0_i32_0 : i32, i32
  }
  func.func @transform_3(%arg0: i32, %arg1: i32) -> (i32, i32, i32) {
    %c0_i32 = arith.constant 0 : i32
    %c0_i32_0 = arith.constant 0 : i32
    %c0_i32_1 = arith.constant 0 : i32
    return %arg1, %c0_i32, %c0_i32_0 : i32, i32, i32
  }
  func.func @transform_4(%arg0: i32, %arg1: i32) -> (i32, i32, i32) {
    %c0_i32 = arith.constant 0 : i32
    %c0_i32_0 = arith.constant 0 : i32
    %c0_i32_1 = arith.constant 0 : i32
    return %arg1, %c0_i32, %c0_i32_0 : i32, i32, i32
  }
  func.func @transform_5(%arg0: i32, %arg1: i32) -> (i32, i32, i32) {
    %c0_i32 = arith.constant 0 : i32
    %c0_i32_0 = arith.constant 0 : i32
    %c0_i32_1 = arith.constant 0 : i32
    return %arg1, %c0_i32, %c0_i32_0 : i32, i32, i32
  }
  func.func @transform_6(%arg0: i32, %arg1: i32) -> (i32, i32, i32) {
    %c0_i32 = arith.constant 0 : i32
    %c0_i32_0 = arith.constant 0 : i32
    %c0_i32_1 = arith.constant 0 : i32
    return %arg1, %c0_i32, %c0_i32_0 : i32, i32, i32
  }
  func.func @transform_7(%arg0: i32, %arg1: i32) -> (i32, i32, i32) {
    %c0_i32 = arith.constant 0 : i32
    %c0_i32_0 = arith.constant 0 : i32
    %c0_i32_1 = arith.constant 0 : i32
    return %arg1, %c0_i32, %c0_i32_0 : i32, i32, i32
  }
  func.func @transform_8(%arg0: i32, %arg1: i32) -> (i32, i32, i32) {
    %c0_i32 = arith.constant 0 : i32
    %c0_i32_0 = arith.constant 0 : i32
    %c0_i32_1 = arith.constant 0 : i32
    return %arg1, %c0_i32, %c0_i32_0 : i32, i32, i32
  }
  func.func @transform_9(%arg0: i32, %arg1: i32) -> (i32, i32, i32) {
    %c0_i32 = arith.constant 0 : i32
    %c0_i32_0 = arith.constant 0 : i32
    %c0_i32_1 = arith.constant 0 : i32
    return %arg1, %c0_i32, %c0_i32_0 : i32, i32, i32
  }
  func.func @transform_10(%arg0: i32, %arg1: i32) -> (i32, i32) {
    %c0_i32 = arith.constant 0 : i32
    %c0_i32_0 = arith.constant 0 : i32
    %c0_i32_1 = arith.constant 0 : i32
    return %c0_i32, %c0_i32_0 : i32, i32
  }
  func.func @transform_11(%arg0: i32, %arg1: i32) -> (i32, i32, i32) {
    %c0_i32 = arith.constant 0 : i32
    %c0_i32_0 = arith.constant 0 : i32
    %c0_i32_1 = arith.constant 0 : i32
    return %arg0, %c0_i32, %c0_i32_0 : i32, i32, i32
  }
}

</mosaic_0001>

<llo_original>
// kernel: tpu_custom_call.1
$region0: #{tpu_custom_call.1}
  #allocation0 [shape = 'u32[]', space=smem, size = 0x4, offset = 0x4, fixed_abs, tag = 'smem constant byte address 0x4 - core index']
  #allocation1 [shape = 'u32[144,128]{1,0:T(1,128)}', space=vmem, size = 0x12000, scoped, tag = 'internal scratch']
  #allocation2 [shape = 'bf16[8,32]{1,0:T(8,128)(2,1)}', space=vmem, size = 0x800, scoped, tag = 'scratch operand']
  #allocation3 [shape = 'f32[8,32]{1,0:T(8,128)}', space=vmem, size = 0x1000, scoped, tag = 'scratch operand']
  %s0 = inlined_call_operand.vmem [shape: f32[2,8,32], index: 0, kind: input, shape index: {}]
  %s1 = inlined_call_operand.vmem [shape: f32[1,32], index: 1, kind: input, shape index: {}]
  %s2 = inlined_call_operand.vmem [shape: f32[1,32], index: 2, kind: input, shape index: {}]
  %s3 = inlined_call_operand.vmem [shape: bf16[4,32,8], index: 3, kind: input, shape index: {}]
  %s4 = inlined_call_operand.vmem [shape: f32[4,1,8], index: 4, kind: input, shape index: {}]
  %s5 = inlined_call_operand.vmem [shape: bf16[4,32,8], index: 5, kind: input, shape index: {}]
  %s6 = inlined_call_operand.vmem [shape: f32[4,1,8], index: 6, kind: input, shape index: {}]
  %s7 = inlined_call_operand.vmem [shape: bf16[4,32,8], index: 7, kind: input, shape index: {}]
  %s8 = inlined_call_operand.vmem [shape: f32[4,1,8], index: 8, kind: input, shape index: {}]
  %s9 = inlined_call_operand.vmem [shape: bf16[4,8,32], index: 9, kind: input, shape index: {}]
  %s10 = inlined_call_operand.vmem [shape: f32[1,32], index: 10, kind: input, shape index: {}]
  %s11 = inlined_call_operand.hbm [shape: f32[2,8,32], index: 11, kind: output, shape index: {}]
  %s12 = sld [smem:[#allocation0]]
  $region85: #{tpu_custom_call.1} parent=0
    _
  %s14 = ssub.s32 1, %s12
  %s15 = scalar_select 0, %s14, %s12
  $region1: #{tpu_custom_call.1} parent=0
    #allocation4 [shape = 'u8[8192]{0}', space=vmem, size = 0x2000, scoped, tag = 'output window, operand 0']
    #allocation5 [shape = 's32[2]{0}', space=sflag, size = 0x8, scoped, tag = 'scoped memory for tpu_custom_call.1']
    %16 = vsyncpa [#allocation5], 0
    %s17 = scalar_lea.sflag [#allocation5], 1
    %18 = vsyncpa %s17, 0
    loop: start=0, step=1, limit=10
    $region2: #{tpu_custom_call.1} parent=1 // loop_pre_header
      _
    $region3: #{tpu_custom_call.1} parent=1 // loop_header
      %s20 = sphi 0, %s24
      %p21 = scmp.ge.s32.totalorder %s20, 10
      %s27 = sphi 0, %s39
      %s28 = sphi 0, %s35
      %s29 = sphi 0, %s27
      %s30 = sphi 0, %s28
      %s31 = sphi 0, %s29
      %s32 = sphi 0, %s30
      %s42 = sphi 0, %s44
      %s45 = sphi 0, %s42
      %s46 = sphi 0, %s45
      %s62 = sphi 0, %s46
      %s66 = sphi 0, %s66
      %s68 = sphi 0, %s66
      %s69 = sphi 0, %s68
      %s83 = sphi 0, %s69
      %s87 = sphi 0, %s87
      %s89 = sphi 0, %s87
      %s90 = sphi 0, %s89
      %s104 = sphi 0, %s90
      %s110 = sphi 0, %s112
      %s113 = sphi 0, %s110
      %s114 = sphi 0, %s113
      %s130 = sphi 0, %s114
      %s136 = sphi 0, %s138
      %s139 = sphi 0, %s136
      %s140 = sphi 0, %s139
      %s156 = sphi 0, %s140
      %s162 = sphi 0, %s164
      %s165 = sphi 0, %s162
      %s166 = sphi 0, %s165
      %s182 = sphi 0, %s166
      %s188 = sphi 0, %s190
      %s191 = sphi 0, %s188
      %s192 = sphi 0, %s191
      %s208 = sphi 0, %s192
      %s214 = sphi 0, %s216
      %s217 = sphi 0, %s214
      %s218 = sphi 0, %s217
      %s234 = sphi 0, %s218
      %s240 = sphi 0, %s242
      %s243 = sphi 0, %s240
      %s244 = sphi 0, %s243
      %s260 = sphi 0, %s244
      %s266 = sphi 0, %s268
      %s269 = sphi 0, %s266
      %s270 = sphi 0, %s269
      %s286 = sphi 0, %s270
      %s290 = sphi 0, %s290
      %s292 = sphi 0, %s290
      %s293 = sphi 0, %s292
      %s307 = sphi 0, %s293
      %s313 = sphi 0, %s315
      %s316 = sphi 0, %s313
      %s317 = sphi 0, %s316
      %s333 = sphi 0, %s317
    $region4: #{tpu_custom_call.1} parent=1 // loop_header_branch
      %23 = sbr.rel (%p21) target = $region8
    $region5: #{tpu_custom_call.1} parent=1 // loop_body
      %s25 = ssub.s32 %s20, 1
      %s26 = ssub.s32 %s20, 2
      %s33 = sadd.s32 1, %s28
      %p34 = scmp.ge.s32.totalorder %s33, 4
      %s35 = scalar_select %p34, 0, %s33
      %s36 = sadd.s32 1, %s27
      %s37 = scalar_select %p34, %s36, %s27
      %p38 = scmp.ge.s32.totalorder %s37, 2
      %s39 = scalar_select %p38, 0, %s37
      %s40 = ssub.s32 %s27, %s39
      %p41 = scmp.eq.s32.totalorder %s40, 0
      %s43 = sadd.s32 %s42, 1
      %s44 = scalar_select %p41, %s42, %s43
      %p47 = pneg %p41
      %p48 = scmp.eq.s32.totalorder %s20, 7
      %p49 = por %p47, %p48
      %p50 = scmp.ne.s32.totalorder %s42, %s45
      %p51 = scmp.eq.s32.totalorder %s20, 0
      %p52 = por %p50, %p51
      %p53 = scmp.ne.s32.totalorder %s42, %s45
      %p54 = scmp.eq.s32.totalorder %s25, 7
      %p55 = por %p53, %p54
      %p56 = scmp.ne.s32.totalorder %s45, %s46
      %p57 = scmp.eq.s32.totalorder %s25, 0
      %p58 = por %p56, %p57
      %p59 = scmp.ne.s32.totalorder %s45, %s46
      %p60 = scmp.eq.s32.totalorder %s26, 7
      %p61 = por %p59, %p60
      %p63 = scmp.ne.s32.totalorder %s46, %s62
      %p64 = scmp.eq.s32.totalorder %s26, 0
      %p65 = por %p63, %p64
      %s67 = sadd.s32 %s66, 1
      %p70 = scmp.eq.s32.totalorder %s20, 7
      %p71 = scmp.ne.s32.totalorder %s66, %s68
      %p72 = scmp.eq.s32.totalorder %s20, 0
      %p73 = por %p71, %p72
      %p74 = scmp.ne.s32.totalorder %s66, %s68
      %p75 = scmp.eq.s32.totalorder %s25, 7
      %p76 = por %p74, %p75
      %p77 = scmp.ne.s32.totalorder %s68, %s69
      %p78 = scmp.eq.s32.totalorder %s25, 0
      %p79 = por %p77, %p78
      %p80 = scmp.ne.s32.totalorder %s68, %s69
      %p81 = scmp.eq.s32.totalorder %s26, 7
      %p82 = por %p80, %p81
      %p84 = scmp.ne.s32.totalorder %s69, %s83
      %p85 = scmp.eq.s32.totalorder %s26, 0
      %p86 = por %p84, %p85
      %s88 = sadd.s32 %s87, 1
      %p91 = scmp.eq.s32.totalorder %s20, 7
      %p92 = scmp.ne.s32.totalorder %s87, %s89
      %p93 = scmp.eq.s32.totalorder %s20, 0
      %p94 = por %p92, %p93
      %p95 = scmp.ne.s32.totalorder %s87, %s89
      %p96 = scmp.eq.s32.totalorder %s25, 7
      %p97 = por %p95, %p96
      %p98 = scmp.ne.s32.totalorder %s89, %s90
      %p99 = scmp.eq.s32.totalorder %s25, 0
      %p100 = por %p98, %p99
      %p101 = scmp.ne.s32.totalorder %s89, %s90
      %p102 = scmp.eq.s32.totalorder %s26, 7
      %p103 = por %p101, %p102
      %p105 = scmp.ne.s32.totalorder %s90, %s104
      %p106 = scmp.eq.s32.totalorder %s26, 0
      %p107 = por %p105, %p106
      %s108 = ssub.s32 %s28, %s35
      %p109 = scmp.eq.s32.totalorder %s108, 0
      %s111 = sadd.s32 %s110, 1
      %s112 = scalar_select %p109, %s110, %s111
      %p115 = pneg %p109
      %p116 = scmp.eq.s32.totalorder %s20, 7
      %p117 = por %p115, %p116
      %p118 = scmp.ne.s32.totalorder %s110, %s113
      %p119 = scmp.eq.s32.totalorder %s20, 0
      %p120 = por %p118, %p119
      %p121 = scmp.ne.s32.totalorder %s110, %s113
      %p122 = scmp.eq.s32.totalorder %s25, 7
      %p123 = por %p121, %p122
      %p124 = scmp.ne.s32.totalorder %s113, %s114
      %p125 = scmp.eq.s32.totalorder %s25, 0
      %p126 = por %p124, %p125
      %p127 = scmp.ne.s32.totalorder %s113, %s114
      %p128 = scmp.eq.s32.totalorder %s26, 7
      %p129 = por %p127, %p128
      %p131 = scmp.ne.s32.totalorder %s114, %s130
      %p132 = scmp.eq.s32.totalorder %s26, 0
      %p133 = por %p131, %p132
      %s134 = ssub.s32 %s28, %s35
      %p135 = scmp.eq.s32.totalorder %s134, 0
      %s137 = sadd.s32 %s136, 1
      %s138 = scalar_select %p135, %s136, %s137
      %p141 = pneg %p135
      %p142 = scmp.eq.s32.totalorder %s20, 7
      %p143 = por %p141, %p142
      %p144 = scmp.ne.s32.totalorder %s136, %s139
      %p145 = scmp.eq.s32.totalorder %s20, 0
      %p146 = por %p144, %p145
      %p147 = scmp.ne.s32.totalorder %s136, %s139
      %p148 = scmp.eq.s32.totalorder %s25, 7
      %p149 = por %p147, %p148
      %p150 = scmp.ne.s32.totalorder %s139, %s140
      %p151 = scmp.eq.s32.totalorder %s25, 0
      %p152 = por %p150, %p151
      %p153 = scmp.ne.s32.totalorder %s139, %s140
      %p154 = scmp.eq.s32.totalorder %s26, 7
      %p155 = por %p153, %p154
      %p157 = scmp.ne.s32.totalorder %s140, %s156
      %p158 = scmp.eq.s32.totalorder %s26, 0
      %p159 = por %p157, %p158
      %s160 = ssub.s32 %s28, %s35
      %p161 = scmp.eq.s32.totalorder %s160, 0
      %s163 = sadd.s32 %s162, 1
      %s164 = scalar_select %p161, %s162, %s163
      %p167 = pneg %p161
      %p168 = scmp.eq.s32.totalorder %s20, 7
      %p169 = por %p167, %p168
      %p170 = scmp.ne.s32.totalorder %s162, %s165
      %p171 = scmp.eq.s32.totalorder %s20, 0
      %p172 = por %p170, %p171
      %p173 = scmp.ne.s32.totalorder %s162, %s165
      %p174 = scmp.eq.s32.totalorder %s25, 7
      %p175 = por %p173, %p174
      %p176 = scmp.ne.s32.totalorder %s165, %s166
      %p177 = scmp.eq.s32.totalorder %s25, 0
      %p178 = por %p176, %p177
      %p179 = scmp.ne.s32.totalorder %s165, %s166
      %p180 = scmp.eq.s32.totalorder %s26, 7
      %p181 = por %p179, %p180
      %p183 = scmp.ne.s32.totalorder %s166, %s182
      %p184 = scmp.eq.s32.totalorder %s26, 0
      %p185 = por %p183, %p184
      %s186 = ssub.s32 %s28, %s35
      %p187 = scmp.eq.s32.totalorder %s186, 0
      %s189 = sadd.s32 %s188, 1
      %s190 = scalar_select %p187, %s188, %s189
      %p193 = pneg %p187
      %p194 = scmp.eq.s32.totalorder %s20, 7
      %p195 = por %p193, %p194
      %p196 = scmp.ne.s32.totalorder %s188, %s191
      %p197 = scmp.eq.s32.totalorder %s20, 0
      %p198 = por %p196, %p197
      %p199 = scmp.ne.s32.totalorder %s188, %s191
      %p200 = scmp.eq.s32.totalorder %s25, 7
      %p201 = por %p199, %p200
      %p202 = scmp.ne.s32.totalorder %s191, %s192
      %p203 = scmp.eq.s32.totalorder %s25, 0
      %p204 = por %p202, %p203
      %p205 = scmp.ne.s32.totalorder %s191, %s192
      %p206 = scmp.eq.s32.totalorder %s26, 7
      %p207 = por %p205, %p206
      %p209 = scmp.ne.s32.totalorder %s192, %s208
      %p210 = scmp.eq.s32.totalorder %s26, 0
      %p211 = por %p209, %p210
      %s212 = ssub.s32 %s28, %s35
      %p213 = scmp.eq.s32.totalorder %s212, 0
      %s215 = sadd.s32 %s214, 1
      %s216 = scalar_select %p213, %s214, %s215
      %p219 = pneg %p213
      %p220 = scmp.eq.s32.totalorder %s20, 7
      %p221 = por %p219, %p220
      %p222 = scmp.ne.s32.totalorder %s214, %s217
      %p223 = scmp.eq.s32.totalorder %s20, 0
      %p224 = por %p222, %p223
      %p225 = scmp.ne.s32.totalorder %s214, %s217
      %p226 = scmp.eq.s32.totalorder %s25, 7
      %p227 = por %p225, %p226
      %p228 = scmp.ne.s32.totalorder %s217, %s218
      %p229 = scmp.eq.s32.totalorder %s25, 0
      %p230 = por %p228, %p229
      %p231 = scmp.ne.s32.totalorder %s217, %s218
      %p232 = scmp.eq.s32.totalorder %s26, 7
      %p233 = por %p231, %p232
      %p235 = scmp.ne.s32.totalorder %s218, %s234
      %p236 = scmp.eq.s32.totalorder %s26, 0
      %p237 = por %p235, %p236
      %s238 = ssub.s32 %s28, %s35
      %p239 = scmp.eq.s32.totalorder %s238, 0
      %s241 = sadd.s32 %s240, 1
      %s242 = scalar_select %p239, %s240, %s241
      %p245 = pneg %p239
      %p246 = scmp.eq.s32.totalorder %s20, 7
      %p247 = por %p245, %p246
      %p248 = scmp.ne.s32.totalorder %s240, %s243
      %p249 = scmp.eq.s32.totalorder %s20, 0
      %p250 = por %p248, %p249
      %p251 = scmp.ne.s32.totalorder %s240, %s243
      %p252 = scmp.eq.s32.totalorder %s25, 7
      %p253 = por %p251, %p252
      %p254 = scmp.ne.s32.totalorder %s243, %s244
      %p255 = scmp.eq.s32.totalorder %s25, 0
      %p256 = por %p254, %p255
      %p257 = scmp.ne.s32.totalorder %s243, %s244
      %p258 = scmp.eq.s32.totalorder %s26, 7
      %p259 = por %p257, %p258
      %p261 = scmp.ne.s32.totalorder %s244, %s260
      %p262 = scmp.eq.s32.totalorder %s26, 0
      %p263 = por %p261, %p262
      %s264 = ssub.s32 %s28, %s35
      %p265 = scmp.eq.s32.totalorder %s264, 0
      %s267 = sadd.s32 %s266, 1
      %s268 = scalar_select %p265, %s266, %s267
      %p271 = pneg %p265
      %p272 = scmp.eq.s32.totalorder %s20, 7
      %p273 = por %p271, %p272
      %p274 = scmp.ne.s32.totalorder %s266, %s269
      %p275 = scmp.eq.s32.totalorder %s20, 0
      %p276 = por %p274, %p275
      %p277 = scmp.ne.s32.totalorder %s266, %s269
      %p278 = scmp.eq.s32.totalorder %s25, 7
      %p279 = por %p277, %p278
      %p280 = scmp.ne.s32.totalorder %s269, %s270
      %p281 = scmp.eq.s32.totalorder %s25, 0
      %p282 = por %p280, %p281
      %p283 = scmp.ne.s32.totalorder %s269, %s270
      %p284 = scmp.eq.s32.totalorder %s26, 7
      %p285 = por %p283, %p284
      %p287 = scmp.ne.s32.totalorder %s270, %s286
      %p288 = scmp.eq.s32.totalorder %s26, 0
      %p289 = por %p287, %p288
      %s291 = sadd.s32 %s290, 1
      %p294 = scmp.eq.s32.totalorder %s20, 7
      %p295 = scmp.ne.s32.totalorder %s290, %s292
      %p296 = scmp.eq.s32.totalorder %s20, 0
      %p297 = por %p295, %p296
      %p298 = scmp.ne.s32.totalorder %s290, %s292
      %p299 = scmp.eq.s32.totalorder %s25, 7
      %p300 = por %p298, %p299
      %p301 = scmp.ne.s32.totalorder %s292, %s293
      %p302 = scmp.eq.s32.totalorder %s25, 0
      %p303 = por %p301, %p302
      %p304 = scmp.ne.s32.totalorder %s292, %s293
      %p305 = scmp.eq.s32.totalorder %s26, 7
      %p306 = por %p304, %p305
      %p308 = scmp.ne.s32.totalorder %s293, %s307
      %p309 = scmp.eq.s32.totalorder %s26, 0
      %p310 = por %p308, %p309
      %s311 = ssub.s32 %s27, %s39
      %p312 = scmp.eq.s32.totalorder %s311, 0
      %s314 = sadd.s32 %s313, 1
      %s315 = scalar_select %p312, %s313, %s314
      %p318 = pneg %p312
      %p319 = scmp.eq.s32.totalorder %s20, 7
      %p320 = por %p318, %p319
      %p321 = scmp.ne.s32.totalorder %s313, %s316
      %p322 = scmp.eq.s32.totalorder %s20, 0
      %p323 = por %p321, %p322
      %p324 = scmp.ne.s32.totalorder %s313, %s316
      %p325 = scmp.eq.s32.totalorder %s25, 7
      %p326 = por %p324, %p325
      %p327 = scmp.ne.s32.totalorder %s316, %s317
      %p328 = scmp.eq.s32.totalorder %s25, 0
      %p329 = por %p327, %p328
      %p330 = scmp.ne.s32.totalorder %s316, %s317
      %p331 = scmp.eq.s32.totalorder %s26, 7
      %p332 = por %p330, %p331
      %p334 = scmp.ne.s32.totalorder %s317, %s333
      %p335 = scmp.eq.s32.totalorder %s26, 0
      %p336 = por %p334, %p335
      %p337 = scmp.le.s32.totalorder 1, %s20
      %p338 = scmp.lt.s32.totalorder %s20, 9
      %p339 = pnand %p337, %p338
      %p340 = pneg %p339
      // Predicated region
      $region9: #{tpu_custom_call.1} parent=5 // pred_check
        _
      $region10: #{tpu_custom_call.1} parent=5 // pred_check_branch
        %342 = sbr.rel (%p339) target = $region12
      $region11: #{tpu_custom_call.1} parent=5 // pred_region
        %s343 = ssub.s32 %s20, 1
        // Predicated region
        $region13: #{tpu_custom_call.1} parent=11 // pred_check
          %p344 = pneg %p79
        $region14: #{tpu_custom_call.1} parent=11 // pred_check_branch
          %346 = sbr.rel (%p344) target = $region16
        $region15: #{tpu_custom_call.1} parent=11 // pred_region
          _
        $region16: #{tpu_custom_call.1} parent=11 // pred_fallthru
          _
        // Predicated region
        $region17: #{tpu_custom_call.1} parent=11 // pred_check
          %p347 = pneg %p100
        $region18: #{tpu_custom_call.1} parent=11 // pred_check_branch
          %349 = sbr.rel (%p347) target = $region20
        $region19: #{tpu_custom_call.1} parent=11 // pred_region
          _
        $region20: #{tpu_custom_call.1} parent=11 // pred_fallthru
          _
        // Predicated region
        $region21: #{tpu_custom_call.1} parent=11 // pred_check
          %p350 = pneg %p303
        $region22: #{tpu_custom_call.1} parent=11 // pred_check_branch
          %352 = sbr.rel (%p350) target = $region24
        $region23: #{tpu_custom_call.1} parent=11 // pred_region
          _
        $region24: #{tpu_custom_call.1} parent=11 // pred_fallthru
          _
      $region12: #{tpu_custom_call.1} parent=5 // pred_fallthru
        _
      %p353 = scmp.lt.s32.totalorder %s20, 8
      // Predicated region
      $region25: #{tpu_custom_call.1} parent=5 // pred_check
        %p354 = pneg %p353
      $region26: #{tpu_custom_call.1} parent=5 // pred_check_branch
        %356 = sbr.rel (%p354) target = $region28
      $region27: #{tpu_custom_call.1} parent=5 // pred_region
        // Predicated region
        $region29: #{tpu_custom_call.1} parent=27 // pred_check
          %p357 = pneg %p52
        $region30: #{tpu_custom_call.1} parent=27 // pred_check_branch
          %359 = sbr.rel (%p357) target = $region32
        $region31: #{tpu_custom_call.1} parent=27 // pred_region
          %p360 = scmp.lt.s32.totalorder %s27, 1
          %s361 = scalar_select %p360, %s27, 1
          %s362 = smul.addr %s361, 8
          %s363 = scalar_lea.vmem %s0, %s362
        $region32: #{tpu_custom_call.1} parent=27 // pred_fallthru
          _
        // Predicated region
        $region33: #{tpu_custom_call.1} parent=27 // pred_check
          %p364 = pneg %p120
        $region34: #{tpu_custom_call.1} parent=27 // pred_check_branch
          %366 = sbr.rel (%p364) target = $region36
        $region35: #{tpu_custom_call.1} parent=27 // pred_region
          %p367 = scmp.lt.s32.totalorder %s28, 3
          %s368 = scalar_select %p367, %s28, 3
          %s369 = smul.addr %s368, 4
          %s370 = smul.addr %s369, 4
          %s371 = scalar_lea.vmem %s3, %s370
        $region36: #{tpu_custom_call.1} parent=27 // pred_fallthru
          _
        // Predicated region
        $region37: #{tpu_custom_call.1} parent=27 // pred_check
          %p372 = pneg %p146
        $region38: #{tpu_custom_call.1} parent=27 // pred_check_branch
          %374 = sbr.rel (%p372) target = $region40
        $region39: #{tpu_custom_call.1} parent=27 // pred_region
          %p375 = scmp.lt.s32.totalorder %s28, 3
          %s376 = scalar_select %p375, %s28, 3
          %s377 = scalar_lea.vmem %s4, %s376
        $region40: #{tpu_custom_call.1} parent=27 // pred_fallthru
          _
        // Predicated region
        $region41: #{tpu_custom_call.1} parent=27 // pred_check
          %p378 = pneg %p172
        $region42: #{tpu_custom_call.1} parent=27 // pred_check_branch
          %380 = sbr.rel (%p378) target = $region44
        $region43: #{tpu_custom_call.1} parent=27 // pred_region
          %p381 = scmp.lt.s32.totalorder %s28, 3
          %s382 = scalar_select %p381, %s28, 3
          %s383 = smul.addr %s382, 4
          %s384 = smul.addr %s383, 4
          %s385 = scalar_lea.vmem %s5, %s384
        $region44: #{tpu_custom_call.1} parent=27 // pred_fallthru
          _
        // Predicated region
        $region45: #{tpu_custom_call.1} parent=27 // pred_check
          %p386 = pneg %p198
        $region46: #{tpu_custom_call.1} parent=27 // pred_check_branch
          %388 = sbr.rel (%p386) target = $region48
        $region47: #{tpu_custom_call.1} parent=27 // pred_region
          %p389 = scmp.lt.s32.totalorder %s28, 3
          %s390 = scalar_select %p389, %s28, 3
          %s391 = scalar_lea.vmem %s6, %s390
        $region48: #{tpu_custom_call.1} parent=27 // pred_fallthru
          _
        // Predicated region
        $region49: #{tpu_custom_call.1} parent=27 // pred_check
          %p392 = pneg %p224
        $region50: #{tpu_custom_call.1} parent=27 // pred_check_branch
          %394 = sbr.rel (%p392) target = $region52
        $region51: #{tpu_custom_call.1} parent=27 // pred_region
          %p395 = scmp.lt.s32.totalorder %s28, 3
          %s396 = scalar_select %p395, %s28, 3
          %s397 = smul.addr %s396, 4
          %s398 = smul.addr %s397, 4
          %s399 = scalar_lea.vmem %s7, %s398
        $region52: #{tpu_custom_call.1} parent=27 // pred_fallthru
          _
        // Predicated region
        $region53: #{tpu_custom_call.1} parent=27 // pred_check
          %p400 = pneg %p250
        $region54: #{tpu_custom_call.1} parent=27 // pred_check_branch
          %402 = sbr.rel (%p400) target = $region56
        $region55: #{tpu_custom_call.1} parent=27 // pred_region
          %p403 = scmp.lt.s32.totalorder %s28, 3
          %s404 = scalar_select %p403, %s28, 3
          %s405 = scalar_lea.vmem %s8, %s404
        $region56: #{tpu_custom_call.1} parent=27 // pred_fallthru
          _
        // Predicated region
        $region57: #{tpu_custom_call.1} parent=27 // pred_check
          %p406 = pneg %p276
        $region58: #{tpu_custom_call.1} parent=27 // pred_check_branch
          %408 = sbr.rel (%p406) target = $region60
        $region59: #{tpu_custom_call.1} parent=27 // pred_region
          %p409 = scmp.lt.s32.totalorder %s28, 3
          %s410 = scalar_select %p409, %s28, 3
          %s411 = smul.addr %s410, 4
          %s412 = scalar_lea.vmem %s9, %s411
        $region60: #{tpu_custom_call.1} parent=27 // pred_fallthru
          _
      $region28: #{tpu_custom_call.1} parent=5 // pred_fallthru
        _
      %p413 = scmp.le.s32.totalorder 1, %s20
      %p414 = scmp.lt.s32.totalorder %s20, 9
      %p415 = pnand %p413, %p414
      %p416 = pneg %p415
      // Predicated region
      $region61: #{tpu_custom_call.1} parent=5 // pred_check
        _
      $region62: #{tpu_custom_call.1} parent=5 // pred_check_branch
        %418 = sbr.rel (%p415) target = $region64
      $region63: #{tpu_custom_call.1} parent=5 // pred_region
        %s419 = ssub.s32 %s20, 1
        %p420 = scmp.lt.s32.totalorder %s29, 1
        %s421 = scalar_select %p420, %s29, 1
        %s422 = smul.addr %s421, 8
        %s423 = scalar_lea.vmem %s0, %s422
        %p424 = pneg %p58
        %p425 = pneg %p55
        %p426 = pneg %p79
        %p427 = pneg %p76
        %p428 = pneg %p100
        %p429 = pneg %p97
        %p430 = scmp.lt.s32.totalorder %s30, 3
        %s431 = scalar_select %p430, %s30, 3
        %s432 = smul.addr %s431, 4
        %s433 = smul.addr %s432, 4
        %s434 = scalar_lea.vmem %s3, %s433
        %p435 = pneg %p126
        %p436 = pneg %p123
        %p437 = scmp.lt.s32.totalorder %s30, 3
        %s438 = scalar_select %p437, %s30, 3
        %s439 = scalar_lea.vmem %s4, %s438
        %p440 = pneg %p152
        %p441 = pneg %p149
        %p442 = scmp.lt.s32.totalorder %s30, 3
        %s443 = scalar_select %p442, %s30, 3
        %s444 = smul.addr %s443, 4
        %s445 = smul.addr %s444, 4
        %s446 = scalar_lea.vmem %s5, %s445
        %p447 = pneg %p178
        %p448 = pneg %p175
        %p449 = scmp.lt.s32.totalorder %s30, 3
        %s450 = scalar_select %p449, %s30, 3
        %s451 = scalar_lea.vmem %s6, %s450
        %p452 = pneg %p204
        %p453 = pneg %p201
        %p454 = scmp.lt.s32.totalorder %s30, 3
        %s455 = scalar_select %p454, %s30, 3
        %s456 = smul.addr %s455, 4
        %s457 = smul.addr %s456, 4
        %s458 = scalar_lea.vmem %s7, %s457
        %p459 = pneg %p230
        %p460 = pneg %p227
        %p461 = scmp.lt.s32.totalorder %s30, 3
        %s462 = scalar_select %p461, %s30, 3
        %s463 = scalar_lea.vmem %s8, %s462
        %p464 = pneg %p256
        %p465 = pneg %p253
        %p466 = scmp.lt.s32.totalorder %s30, 3
        %s467 = scalar_select %p466, %s30, 3
        %s468 = smul.addr %s467, 4
        %s469 = scalar_lea.vmem %s9, %s468
        %p470 = pneg %p282
        %p471 = pneg %p279
        %p472 = pneg %p303
        %p473 = pneg %p300
        %p474 = pneg %p329
        %p475 = pneg %p326
        %s476 = sand.u32 %s316, 1
        %s477 = scalar_lea.sflag [#allocation5], %s476
        %s478 = sand.u32 %s316, 1
        %s479 = smul.addr %s478, 8
        %s480 = scalar_lea.vmem [#allocation4], %s479
        %p481 = scmp.lt.s32.totalorder %s29, 1
        %s482 = scalar_select %p481, %s29, 1
        %s483 = smul.addr %s482, 8
        %s484 = scalar_lea.vmem %s0, %s483
        %p485 = scmp.lt.s32.totalorder %s30, 3
        %s486 = scalar_select %p485, %s30, 3
        %s487 = smul.addr %s486, 4
        %s488 = smul.addr %s487, 4
        %s489 = scalar_lea.vmem %s3, %s488
        %p490 = scmp.lt.s32.totalorder %s30, 3
        %s491 = scalar_select %p490, %s30, 3
        %s492 = scalar_lea.vmem %s4, %s491
        %p493 = scmp.lt.s32.totalorder %s30, 3
        %s494 = scalar_select %p493, %s30, 3
        %s495 = smul.addr %s494, 4
        %s496 = smul.addr %s495, 4
        %s497 = scalar_lea.vmem %s5, %s496
        %p498 = scmp.lt.s32.totalorder %s30, 3
        %s499 = scalar_select %p498, %s30, 3
        %s500 = scalar_lea.vmem %s6, %s499
        %p501 = scmp.lt.s32.totalorder %s30, 3
        %s502 = scalar_select %p501, %s30, 3
        %s503 = smul.addr %s502, 4
        %s504 = smul.addr %s503, 4
        %s505 = scalar_lea.vmem %s7, %s504
        %p506 = scmp.lt.s32.totalorder %s30, 3
        %s507 = scalar_select %p506, %s30, 3
        %s508 = scalar_lea.vmem %s8, %s507
        %p509 = scmp.lt.s32.totalorder %s30, 3
        %s510 = scalar_select %p509, %s30, 3
        %s511 = smul.addr %s510, 4
        %s512 = scalar_lea.vmem %s9, %s511
        %p514 = scmp.eq.s32.totalorder %s30, 0
        // Predicated region
        $region65: #{tpu_custom_call.1} parent=63 // pred_check
          %p515 = pneg %p514
        $region66: #{tpu_custom_call.1} parent=63 // pred_check_branch
          %517 = sbr.rel (%p515) target = $region68
        $region67: #{tpu_custom_call.1} parent=63 // pred_region
          %v518 = vld [vmem:[%s484] sm:$0xff]
          %v519 = vld [vmem:[%s1] sm:$0x1]
          %v520 = vld [vmem:[%s2] sm:$0x1]
          %vm521 = vcmask 261120
          %v522 = vsel %vm521, %v518, 0.0
          %523 = vadd.xlane.f32.xlu0 %v522
          %v524 = vpop.xlane.xlu0 %523
          %v525 = vrcp.pop 32.0
          %v526 = vmul.f32 %v524, %v525
          %v527 = vsub.f32 %v518, %v526
          %v528 = vmul.f32 %v527, %v527
          %v529 = vsel %vm521, %v528, 0.0
          %530 = vadd.xlane.f32.xlu0 %v529
          %v531 = vpop.xlane.xlu0 %530
          %v532 = vmul.f32 %v531, %v525
          %v533 = vadd.f32 %v532, 1e-05
          %v534 = vrsqrt.pop %v533
          %v535 = vmul.f32 %v527, %v534
          %v537 = vlaneseq
          %v538 = vshrl.u32 %v537, 7
          %v539 = vsub.s32 0, %v538
          %v540 = vrot.slane %v519, %v539
          %v542 = vmul.f32 %v535, %v540
          %v544 = vlaneseq
          %v545 = vshrl.u32 %v544, 7
          %v546 = vsub.s32 0, %v545
          %v547 = vrot.slane %v520, %v546
          %v549 = vadd.f32 %v542, %v547
          %v550 = vpack.c.bf16 %v549, %v549
          %vm551 = vcmask 257024
          %552 = vst.msk [vmem:[#allocation2] sm:$0xf] %vm551, %v550
          %553 = vst.msk [vmem:[#allocation3] sm:$0xff] %vm521, 0.0
        $region68: #{tpu_custom_call.1} parent=63 // pred_fallthru
          _
        %v554 = vld [vmem:[#allocation2] sm:$0xf]
        %v555 = vld [vmem:[%s489] sm:$0xf]
        %v556 = vld [vmem:[%s489 + $0x4] sm:$0xf]
        %v557 = vld [vmem:[%s489 + $0x8] sm:$0xf]
        %v558 = vld [vmem:[%s489 + $0xc] sm:$0xf]
        %v559 = vld [vmem:[%s492] sm:$0x1]
        %v561 = vlaneseq
        %v562 = vshrl.u32 %v561, 7
        %v563 = vsub.s32 0, %v562
        %v564 = vrot.slane %v559, %v563
        %v570 = vunpack.c.l.b16 %v555
        %v571 = vunpack.c.l.b16 %v556
        %v572 = vunpack.c.l.b16 %v557
        %v573 = vunpack.c.l.b16 %v558
        %v574 = vpack.c.b16 %v571, %v570
        %v575 = vpack.c.b16 %v573, %v572
        %vm578 = vcmask 261120
        %v580 = vsel %vm578, %v554, 0
        %582 = vmatprep.subr.bf16.mxu0 0
        %583 = vmatpush1.bf16.msra.mxu0 %v574
        %584 = vmatprep.subr.bf16.mxu0 0
        %585 = vmatpush1.bf16.msra.mxu0 %v575
        %586 = vmatprep.subr.bf16.mxu0 0
        %587 = vmatpush1.bf16.msra.mxu0 0
        %588 = vmatprep.subr.bf16.mxu0 0
        %589 = vmatpush1.bf16.msra.mxu0 0
        %590 = vmatprep.subr.bf16.mxu0 0
        %591 = vmatpush1.bf16.msra.mxu0 0
        %592 = vmatprep.subr.bf16.mxu0 0
        %593 = vmatpush1.bf16.msra.mxu0 0
        %594 = vmatprep.subr.bf16.mxu0 0
        %595 = vmatpush1.bf16.msra.mxu0 0
        %596 = vmatprep.subr.bf16.mxu0 0
        %597 = vmatpush1.bf16.msra.mxu0 0
        %598 = vmatprep.subr.bf16.mxu0 0
        %599 = vmatpush1.bf16.msra.mxu0 0
        %600 = vmatprep.subr.bf16.mxu0 0
        %601 = vmatpush1.bf16.msra.mxu0 0
        %602 = vmatprep.subr.bf16.mxu0 0
        %603 = vmatpush1.bf16.msra.mxu0 0
        %604 = vmatprep.subr.bf16.mxu0 0
        %605 = vmatpush1.bf16.msra.mxu0 0
        %606 = vmatprep.subr.bf16.mxu0 0
        %607 = vmatpush1.bf16.msra.mxu0 0
        %608 = vmatprep.subr.bf16.mxu0 0
        %609 = vmatpush1.bf16.msra.mxu0 0
        %610 = vmatprep.subr.bf16.mxu0 0
        %611 = vmatpush1.bf16.msra.mxu0 0
        %612 = vmatprep.subr.bf16.mxu0 0
        %613 = vmatpush1.bf16.msra.mxu0 0
        %614 = vmatprep.mubr.bf16.mxu0 0
        %615 = vmatmul.mubr.bf16.gmra.mrb[0].mxu0 %v580
        %v616 = vpop.f32.mrb[0].mxu0
        %v617 = vadd.f32 %v564, %v616
        %v618 = vpop.f32.mrb[0].mxu0
        %v619 = vpop.f32.mrb[0].mxu0
        %v620 = vpop.f32.mrb[0].mxu0
        %621 = vdwg.mxu0
        %v622 = vmul.f32 %v617, 0.35355338
        %v623 = vld [vmem:[%s497] sm:$0xf]
        %v624 = vld [vmem:[%s497 + $0x4] sm:$0xf]
        %v625 = vld [vmem:[%s497 + $0x8] sm:$0xf]
        %v626 = vld [vmem:[%s497 + $0xc] sm:$0xf]
        %v627 = vld [vmem:[%s500] sm:$0x1]
        %v629 = vlaneseq
        %v630 = vshrl.u32 %v629, 7
        %v631 = vsub.s32 0, %v630
        %v632 = vrot.slane %v627, %v631
        %v638 = vunpack.c.l.b16 %v623
        %v639 = vunpack.c.l.b16 %v624
        %v640 = vunpack.c.l.b16 %v625
        %v641 = vunpack.c.l.b16 %v626
        %v642 = vpack.c.b16 %v639, %v638
        %v643 = vpack.c.b16 %v641, %v640
        %646 = vmatprep.subr.bf16.mxu0 0
        %647 = vmatpush1.bf16.msra.mxu0 %v642
        %648 = vmatprep.subr.bf16.mxu0 0
        %649 = vmatpush1.bf16.msra.mxu0 %v643
        %650 = vmatprep.subr.bf16.mxu0 0
        %651 = vmatpush1.bf16.msra.mxu0 0
        %652 = vmatprep.subr.bf16.mxu0 0
        %653 = vmatpush1.bf16.msra.mxu0 0
        %654 = vmatprep.subr.bf16.mxu0 0
        %655 = vmatpush1.bf16.msra.mxu0 0
        %656 = vmatprep.subr.bf16.mxu0 0
        %657 = vmatpush1.bf16.msra.mxu0 0
        %658 = vmatprep.subr.bf16.mxu0 0
        %659 = vmatpush1.bf16.msra.mxu0 0
        %660 = vmatprep.subr.bf16.mxu0 0
        %661 = vmatpush1.bf16.msra.mxu0 0
        %662 = vmatprep.subr.bf16.mxu0 0
        %663 = vmatpush1.bf16.msra.mxu0 0
        %664 = vmatprep.subr.bf16.mxu0 0
        %665 = vmatpush1.bf16.msra.mxu0 0
        %666 = vmatprep.subr.bf16.mxu0 0
        %667 = vmatpush1.bf16.msra.mxu0 0
        %668 = vmatprep.subr.bf16.mxu0 0
        %669 = vmatpush1.bf16.msra.mxu0 0
        %670 = vmatprep.subr.bf16.mxu0 0
        %671 = vmatpush1.bf16.msra.mxu0 0
        %672 = vmatprep.subr.bf16.mxu0 0
        %673 = vmatpush1.bf16.msra.mxu0 0
        %674 = vmatprep.subr.bf16.mxu0 0
        %675 = vmatpush1.bf16.msra.mxu0 0
        %676 = vmatprep.subr.bf16.mxu0 0
        %677 = vmatpush1.bf16.msra.mxu0 0
        %678 = vmatprep.mubr.bf16.mxu0 0
        %679 = vmatmul.mubr.bf16.gmra.mrb[0].mxu0 %v580
        %v680 = vpop.f32.mrb[0].mxu0
        %v681 = vadd.f32 %v632, %v680
        %v682 = vpop.f32.mrb[0].mxu0
        %v683 = vpop.f32.mrb[0].mxu0
        %v684 = vpop.f32.mrb[0].mxu0
        %685 = vdwg.mxu0
        %v686 = vld [vmem:[%s505] sm:$0xf]
        %v687 = vld [vmem:[%s505 + $0x4] sm:$0xf]
        %v688 = vld [vmem:[%s505 + $0x8] sm:$0xf]
        %v689 = vld [vmem:[%s505 + $0xc] sm:$0xf]
        %v690 = vld [vmem:[%s508] sm:$0x1]
        %v692 = vlaneseq
        %v693 = vshrl.u32 %v692, 7
        %v694 = vsub.s32 0, %v693
        %v695 = vrot.slane %v690, %v694
        %v701 = vunpack.c.l.b16 %v686
        %v702 = vunpack.c.l.b16 %v687
        %v703 = vunpack.c.l.b16 %v688
        %v704 = vunpack.c.l.b16 %v689
        %v705 = vpack.c.b16 %v702, %v701
        %v706 = vpack.c.b16 %v704, %v703
        %709 = vmatprep.subr.bf16.mxu0 0
        %710 = vmatpush1.bf16.msra.mxu0 %v705
        %711 = vmatprep.subr.bf16.mxu0 0
        %712 = vmatpush1.bf16.msra.mxu0 %v706
        %713 = vmatprep.subr.bf16.mxu0 0
        %714 = vmatpush1.bf16.msra.mxu0 0
        %715 = vmatprep.subr.bf16.mxu0 0
        %716 = vmatpush1.bf16.msra.mxu0 0
        %717 = vmatprep.subr.bf16.mxu0 0
        %718 = vmatpush1.bf16.msra.mxu0 0
        %719 = vmatprep.subr.bf16.mxu0 0
        %720 = vmatpush1.bf16.msra.mxu0 0
        %721 = vmatprep.subr.bf16.mxu0 0
        %722 = vmatpush1.bf16.msra.mxu0 0
        %723 = vmatprep.subr.bf16.mxu0 0
        %724 = vmatpush1.bf16.msra.mxu0 0
        %725 = vmatprep.subr.bf16.mxu0 0
        %726 = vmatpush1.bf16.msra.mxu0 0
        %727 = vmatprep.subr.bf16.mxu0 0
        %728 = vmatpush1.bf16.msra.mxu0 0
        %729 = vmatprep.subr.bf16.mxu0 0
        %730 = vmatpush1.bf16.msra.mxu0 0
        %731 = vmatprep.subr.bf16.mxu0 0
        %732 = vmatpush1.bf16.msra.mxu0 0
        %733 = vmatprep.subr.bf16.mxu0 0
        %734 = vmatpush1.bf16.msra.mxu0 0
        %735 = vmatprep.subr.bf16.mxu0 0
        %736 = vmatpush1.bf16.msra.mxu0 0
        %737 = vmatprep.subr.bf16.mxu0 0
        %738 = vmatpush1.bf16.msra.mxu0 0
        %739 = vmatprep.subr.bf16.mxu0 0
        %740 = vmatpush1.bf16.msra.mxu0 0
        %741 = vmatprep.mubr.bf16.mxu0 0
        %742 = vmatmul.mubr.bf16.gmra.mrb[0].mxu0 %v580
        %v743 = vpop.f32.mrb[0].mxu0
        %v744 = vadd.f32 %v695, %v743
        %v745 = vpop.f32.mrb[0].mxu0
        %v746 = vpop.f32.mrb[0].mxu0
        %v747 = vpop.f32.mrb[0].mxu0
        %748 = vdwg.mxu0
        %v749 = vpack.c.bf16 %v622, %v622
        %v750 = vpack.c.bf16 %v681, %v681
        %vm751 = vcmask 64512
        %v753 = vsel %vm751, %v749, 0
        %v756 = vsel %vm751, %v750, 0
        %758 = vmatprep.subr.bf16.mxu0 0
        %759 = vmatpush1.bf16.xpose.msra.mxu0 %v756
        %760 = vmatprep.subr.bf16.mxu0 0
        %761 = vmatpush1.bf16.xpose.msra.mxu0 0
        %762 = vmatprep.subr.bf16.mxu0 0
        %763 = vmatpush1.bf16.xpose.msra.mxu0 0
        %764 = vmatprep.subr.bf16.mxu0 0
        %765 = vmatpush1.bf16.xpose.msra.mxu0 0
        %766 = vmatprep.subr.bf16.mxu0 0
        %767 = vmatpush1.bf16.xpose.msra.mxu0 0
        %768 = vmatprep.subr.bf16.mxu0 0
        %769 = vmatpush1.bf16.xpose.msra.mxu0 0
        %770 = vmatprep.subr.bf16.mxu0 0
        %771 = vmatpush1.bf16.xpose.msra.mxu0 0
        %772 = vmatprep.subr.bf16.mxu0 0
        %773 = vmatpush1.bf16.xpose.msra.mxu0 0
        %774 = vmatprep.subr.bf16.mxu0 0
        %775 = vmatpush1.bf16.xpose.msra.mxu0 0
        %776 = vmatprep.subr.bf16.mxu0 0
        %777 = vmatpush1.bf16.xpose.msra.mxu0 0
        %778 = vmatprep.subr.bf16.mxu0 0
        %779 = vmatpush1.bf16.xpose.msra.mxu0 0
        %780 = vmatprep.subr.bf16.mxu0 0
        %781 = vmatpush1.bf16.xpose.msra.mxu0 0
        %782 = vmatprep.subr.bf16.mxu0 0
        %783 = vmatpush1.bf16.xpose.msra.mxu0 0
        %784 = vmatprep.subr.bf16.mxu0 0
        %785 = vmatpush1.bf16.xpose.msra.mxu0 0
        %786 = vmatprep.subr.bf16.mxu0 0
        %787 = vmatpush1.bf16.xpose.msra.mxu0 0
        %788 = vmatprep.subr.bf16.mxu0 0
        %789 = vmatpush1.bf16.xpose.msra.mxu0 0
        %790 = vmatprep.mubr.bf16.mxu0 0
        %791 = vmatmul.mubr.bf16.gmra.mrb[0].mxu0 %v753
        %v792 = vpop.f32.mrb[0].mxu0
        %v793 = vadd.f32 0.0, %v792
        %v794 = vpop.f32.mrb[0].mxu0
        %v795 = vpop.f32.mrb[0].mxu0
        %v796 = vpop.f32.mrb[0].mxu0
        %797 = vdwg.mxu0
        %v798 = vsel %vm751, %v793, -inf
        %799 = vmax.xlane.f32.xlu0 %v798
        %v800 = vpop.xlane.xlu0 %799
        %v801 = vsub.f32 %v793, %v800
        %v802 = vmul.f32 %v801, 1.442695
        %v803 = vpow.pop %v802
        %v804 = vsel %vm751, %v803, 0.0
        %805 = vadd.xlane.f32.xlu0 %v804
        %v806 = vpop.xlane.xlu0 %805
        %v807 = vrcp.pop %v806
        %v808 = vmul.f32 %v803, %v807
        %v809 = vpack.c.bf16 %v808, %v808
        %v810 = vpack.c.bf16 %v744, %v744
        %v812 = vsel %vm751, %v809, 0
        %vm814 = vcmask 1043456
        %v816 = vsel %vm814, %v810, 0
        %818 = vmatprep.subr.bf16.mxu0 0
        %819 = vmatpush1.bf16.msra.mxu0 %v816
        %820 = vmatprep.subr.bf16.mxu0 0
        %821 = vmatpush1.bf16.msra.mxu0 0
        %822 = vmatprep.subr.bf16.mxu0 0
        %823 = vmatpush1.bf16.msra.mxu0 0
        %824 = vmatprep.subr.bf16.mxu0 0
        %825 = vmatpush1.bf16.msra.mxu0 0
        %826 = vmatprep.subr.bf16.mxu0 0
        %827 = vmatpush1.bf16.msra.mxu0 0
        %828 = vmatprep.subr.bf16.mxu0 0
        %829 = vmatpush1.bf16.msra.mxu0 0
        %830 = vmatprep.subr.bf16.mxu0 0
        %831 = vmatpush1.bf16.msra.mxu0 0
        %832 = vmatprep.subr.bf16.mxu0 0
        %833 = vmatpush1.bf16.msra.mxu0 0
        %834 = vmatprep.subr.bf16.mxu0 0
        %835 = vmatpush1.bf16.msra.mxu0 0
        %836 = vmatprep.subr.bf16.mxu0 0
        %837 = vmatpush1.bf16.msra.mxu0 0
        %838 = vmatprep.subr.bf16.mxu0 0
        %839 = vmatpush1.bf16.msra.mxu0 0
        %840 = vmatprep.subr.bf16.mxu0 0
        %841 = vmatpush1.bf16.msra.mxu0 0
        %842 = vmatprep.subr.bf16.mxu0 0
        %843 = vmatpush1.bf16.msra.mxu0 0
        %844 = vmatprep.subr.bf16.mxu0 0
        %845 = vmatpush1.bf16.msra.mxu0 0
        %846 = vmatprep.subr.bf16.mxu0 0
        %847 = vmatpush1.bf16.msra.mxu0 0
        %848 = vmatprep.subr.bf16.mxu0 0
        %849 = vmatpush1.bf16.msra.mxu0 0
        %850 = vmatprep.mubr.bf16.mxu0 0
        %851 = vmatmul.mubr.bf16.gmra.mrb[0].mxu0 %v812
        %v852 = vpop.f32.mrb[0].mxu0
        %v853 = vadd.f32 0.0, %v852
        %v854 = vpop.f32.mrb[0].mxu0
        %v855 = vpop.f32.mrb[0].mxu0
        %v856 = vpop.f32.mrb[0].mxu0
        %857 = vdwg.mxu0
        %v858 = vld [vmem:[#allocation3] sm:$0xff]
        %v859 = vpack.c.bf16 %v853, %v853
        %v860 = vld [vmem:[%s512] sm:$0xf]
        %v862 = vsel %vm751, %v859, 0
        %v865 = vsel %vm814, %v860, 0
        %867 = vmatprep.subr.bf16.mxu0 0
        %868 = vmatpush1.bf16.msra.mxu0 %v865
        %869 = vmatprep.subr.bf16.mxu0 0
        %870 = vmatpush1.bf16.msra.mxu0 0
        %871 = vmatprep.subr.bf16.mxu0 0
        %872 = vmatpush1.bf16.msra.mxu0 0
        %873 = vmatprep.subr.bf16.mxu0 0
        %874 = vmatpush1.bf16.msra.mxu0 0
        %875 = vmatprep.subr.bf16.mxu0 0
        %876 = vmatpush1.bf16.msra.mxu0 0
        %877 = vmatprep.subr.bf16.mxu0 0
        %878 = vmatpush1.bf16.msra.mxu0 0
        %879 = vmatprep.subr.bf16.mxu0 0
        %880 = vmatpush1.bf16.msra.mxu0 0
        %881 = vmatprep.subr.bf16.mxu0 0
        %882 = vmatpush1.bf16.msra.mxu0 0
        %883 = vmatprep.subr.bf16.mxu0 0
        %884 = vmatpush1.bf16.msra.mxu0 0
        %885 = vmatprep.subr.bf16.mxu0 0
        %886 = vmatpush1.bf16.msra.mxu0 0
        %887 = vmatprep.subr.bf16.mxu0 0
        %888 = vmatpush1.bf16.msra.mxu0 0
        %889 = vmatprep.subr.bf16.mxu0 0
        %890 = vmatpush1.bf16.msra.mxu0 0
        %891 = vmatprep.subr.bf16.mxu0 0
        %892 = vmatpush1.bf16.msra.mxu0 0
        %893 = vmatprep.subr.bf16.mxu0 0
        %894 = vmatpush1.bf16.msra.mxu0 0
        %895 = vmatprep.subr.bf16.mxu0 0
        %896 = vmatpush1.bf16.msra.mxu0 0
        %897 = vmatprep.subr.bf16.mxu0 0
        %898 = vmatpush1.bf16.msra.mxu0 0
        %899 = vmatprep.mubr.bf16.mxu0 0
        %900 = vmatmul.mubr.bf16.gmra.mrb[0].mxu0 %v862
        %v901 = vpop.f32.mrb[0].mxu0
        %v902 = vadd.f32 0.0, %v901
        %v903 = vpop.f32.mrb[0].mxu0
        %v904 = vpop.f32.mrb[0].mxu0
        %v905 = vpop.f32.mrb[0].mxu0
        %906 = vdwg.mxu0
        %v907 = vadd.f32 %v858, %v902
        %908 = vst.msk [vmem:[#allocation3] sm:$0xff] %vm578, %v907
        %p909 = scmp.eq.s32.totalorder %s30, 3
        // Predicated region
        $region69: #{tpu_custom_call.1} parent=63 // pred_check
          %p910 = pneg %p909
        $region70: #{tpu_custom_call.1} parent=63 // pred_check_branch
          %912 = sbr.rel (%p910) target = $region72
        $region71: #{tpu_custom_call.1} parent=63 // pred_region
          %v913 = vld [vmem:[#allocation3] sm:$0xff]
          %v914 = vld [vmem:[%s10] sm:$0x1]
          %v916 = vlaneseq
          %v917 = vshrl.u32 %v916, 7
          %v918 = vsub.s32 0, %v917
          %v919 = vrot.slane %v914, %v918
          %v921 = vadd.f32 %v913, %v919
          %v922 = vld [vmem:[%s484] sm:$0xff]
          %v923 = vadd.f32 %v921, %v922
          %924 = vst.msk [vmem:[%s480] sm:$0xff] %vm578, %v923
        $region72: #{tpu_custom_call.1} parent=63 // pred_fallthru
          _
        %s925 = sand.u32 %s316, 1
        %s926 = scalar_lea.sflag [#allocation5], %s925
        %s927 = sand.u32 %s316, 1
        %s928 = smul.addr %s927, 8
        %s929 = scalar_lea.vmem [#allocation4], %s928
        // Predicated region
        $region73: #{tpu_custom_call.1} parent=63 // pred_check
          %p930 = pneg %p326
        $region74: #{tpu_custom_call.1} parent=63 // pred_check_branch
          %932 = sbr.rel (%p930) target = $region76
        $region75: #{tpu_custom_call.1} parent=63 // pred_region
          %s934 = ssub.s32 128, 128
          %935 = vsyncadd %s926, %s934
          %s936 = smul.addr %s29, 128
          %s937 = scalar_lea.hbm %s11, %s936
          %s939 = sshll.u32 %s929, 4
          %s940 = int_to_ptr.vmem [resolvable:$true] %s939
          %942 = dma.vmem_to_hbm [thread:$0]  %s940, 128, %s937, %s926
        $region76: #{tpu_custom_call.1} parent=63 // pred_fallthru
          _
      $region64: #{tpu_custom_call.1} parent=5 // pred_fallthru
        _
      %p943 = scmp.le.s32.totalorder 2, %s20
      // Predicated region
      $region77: #{tpu_custom_call.1} parent=5 // pred_check
        %p944 = pneg %p943
      $region78: #{tpu_custom_call.1} parent=5 // pred_check_branch
        %946 = sbr.rel (%p944) target = $region80
      $region79: #{tpu_custom_call.1} parent=5 // pred_region
        %s947 = ssub.s32 %s20, 2
        // Predicated region
        $region81: #{tpu_custom_call.1} parent=79 // pred_check
          %p948 = pneg %p332
        $region82: #{tpu_custom_call.1} parent=79 // pred_check_branch
          %950 = sbr.rel (%p948) target = $region84
        $region83: #{tpu_custom_call.1} parent=79 // pred_region
          %s951 = sand.u32 %s317, 1
          %s952 = scalar_lea.sflag [#allocation5], %s951
          %s953 = sand.u32 %s317, 1
          %s954 = smul.addr %s953, 8
          %s955 = scalar_lea.vmem [#allocation4], %s954
          %956 = dma.done %s952, 128
        $region84: #{tpu_custom_call.1} parent=79 // pred_fallthru
          _
      $region80: #{tpu_custom_call.1} parent=5 // pred_fallthru
        _
    $region6: #{tpu_custom_call.1} parent=1 // loop_footer
      %s24 = sadd.s32 1, %s20
    $region7: #{tpu_custom_call.1} parent=1 // loop_footer_branch
      %19 = sbr.rel target = $region3
    $region8: #{tpu_custom_call.1} parent=1 // loop_exit
      _
    %957 = vsyncpa [#allocation5], 1
    %s958 = scalar_lea.sflag [#allocation5], 1
    %959 = vsyncpa %s958, 1

</llo_original>
